<compile_context>
chip_gen: v5e
topology: v5e:2x2
jax: 0.10.0
libtpu: 0.0.40
codegen_flags: <defaults>
</compile_context>

<pallas_src>
import functools

import jax
import jax.numpy as jnp
from jax.experimental import pallas as pl
from jax.experimental.pallas import tpu as pltpu


def _proj_matmul_kernel(x_ref, w_ref, o_ref, *, compute_dtype):
    # x_ref: (TM, D) streamed tile, w_ref: (D, TN) (resident for small heads),
    # o_ref: (TM, TN).  Accumulation is always f32 on the MXU.
    x = x_ref[...]
    if compute_dtype is not None:
        x = x.astype(compute_dtype)  # in-kernel cast: no extra HBM pass
    o_ref[...] = jnp.dot(
        x, w_ref[...], preferred_element_type=jnp.float32
    ).astype(o_ref.dtype)


def _round_up(x, m):
    return ((x + m - 1) // m) * m


def _round_down(x, m):
    return (x // m) * m


def _vmem_capacity_bytes():
    try:
        return int(pltpu.get_tpu_info().vmem_capacity_bytes)
    except Exception:
        return 64 << 20  # v7x physical floor: a safe assumption everywhere


def _choose_tiles(nm, d, c, x_item, w_item, o_item, budget):
    """Pick (TM, TN, col_tiles, weight_single_buffered) for the given budget."""
    packing = max(1, 4 // max(1, o_item))
    row_align = 8 * packing  # sublane packing of the row-tiled arrays

    w_full = d * c * w_item
    w_single = w_full > (4 << 20)  # single-buffer only worth it for big weights
    w_bufs = 1 if w_single else 2

    if w_bufs * w_full <= budget // 2:
        # Weight fully resident in VMEM, only the row axis is tiled.
        tn, ct = c, 1
    else:
        # Large classifier head: stream the weight by tiling the class dim.
        w_single = False
        w_bufs = 2
        tn = _round_down((budget // 2) // (w_bufs * d * w_item), 256)
        tn = max(256, min(tn, _round_up(c, 256)))
        ct = pl.cdiv(c, tn)

    remaining = budget - w_bufs * d * tn * w_item
    per_row = 2 * (d * x_item + tn * o_item)  # double-buffered x tile + out tile
    tm = max(row_align, remaining // max(per_row, 1))
    if tm >= nm:
        tm = nm                      # single full-extent block is always legal
    elif tm >= 256:
        tm = _round_down(tm, 256)    # MXU-friendly on v6e/v7x (2x256x256)
    else:
        tm = max(row_align, _round_down(tm, row_align))
    return tm, tn, ct, w_single


def classifier_forward(batch, proj, *, compute_dtype=None):
    """Pallas equivalent of classifier.forward.

    batch: (N, M, D);  proj: (D, C)
    compute_dtype: optional (e.g. jnp.bfloat16) — activation tiles are cast
      inside the kernel (single HBM pass) and hit the native bf16 MXU;
      accumulation stays f32.
    returns (transformed (N, M, C), proj)  [proj returned unmodified]
    """
    N, M, D = batch.shape
    Dw, C = proj.shape
    assert D == Dw
    NM = N * M
    out_dtype = batch.dtype

    x2d = batch.reshape(NM, D)
    w = proj if compute_dtype is None else proj.astype(compute_dtype)

    x_item = jnp.dtype(x2d.dtype).itemsize
    w_item = jnp.dtype(w.dtype).itemsize
    o_item = jnp.dtype(out_dtype).itemsize

    cap = _vmem_capacity_bytes()
    budget = int(cap * 0.65)  # ~83 MiB on 128 MiB parts, ~41 MiB on v7x (64 MiB)

    TM, TN, CT, w_single = _choose_tiles(NM, D, C, x_item, w_item, o_item, budget)
    grid = (pl.cdiv(NM, TM), CT)

    footprint = (2 * TM * D * x_item
                 + (1 if w_single else 2) * D * TN * w_item
                 + 2 * TM * TN * o_item)
    vmem_limit = int(min(max(int(footprint * 1.4) + (2 << 20), 32 << 20),
                         int(cap * 0.9)))

    w_spec_kwargs = {}
    if w_single:
        # Constant index_map -> no pipelining benefit; halves weight VMEM use.
        w_spec_kwargs["pipeline_mode"] = pl.Buffered(1)

    cost = pl.CostEstimate(
        flops=2 * NM * D * C,
        transcendentals=0,
        bytes_accessed=NM * D * x_item + D * C * w_item + NM * C * o_item,
    )

    out2d = pl.pallas_call(
        functools.partial(_proj_matmul_kernel, compute_dtype=compute_dtype),
        out_shape=jax.ShapeDtypeStruct((NM, C), out_dtype),
        grid=grid,
        in_specs=[
            pl.BlockSpec((TM, D), lambda i, j: (i, 0)),
            pl.BlockSpec((D, TN), lambda i, j: (0, j), **w_spec_kwargs),
        ],
        out_specs=pl.BlockSpec((TM, TN), lambda i, j: (i, j)),
        compiler_params=pltpu.CompilerParams(
            # Both axes are independent (no reduction) -> megacore-shardable.
            # TODO(synk): on v7x, verify both TCs are active; switch the row
            # axis to pltpu.CORE_PARALLEL if profiling shows one TC idle.
            dimension_semantics=("parallel", "parallel"),
            vmem_limit_bytes=vmem_limit,
        ),
        cost_estimate=cost,
    )(x2d, w)

    return out2d.reshape(N, M, C), proj


def init_proj(key, model_dim, class_num):
    # nn.init.uniform_(self.proj, -0.05, 0.05)
    return jax.random.uniform(
        key, (model_dim, class_num), dtype=jnp.float32, minval=-0.05, maxval=0.05
    )


if __name__ == "__main__":
    # Small shapes consistent with the module: N sentences, M tokens, hidden_dim, class_number
    N, M, D, C = 2, 8, 32, 4

    key = jax.random.PRNGKey(0)
    k_batch, k_proj = jax.random.split(key)

    batch = jax.random.normal(k_batch, (N, M, D), dtype=jnp.float32)
    proj = init_proj(k_proj, D, C)

    # f32 path: exact semantics of torch.matmul(batch, proj)
    fwd_f32 = jax.jit(classifier_forward)
    transformed, weights = fwd_f32(batch, proj)
    jax.block_until_ready(transformed)
    jax.block_until_ready(weights)

    ref = jnp.matmul(batch, proj)
    assert transformed.shape == (N, M, C)
    assert weights.shape == (D, C)
    assert jnp.allclose(transformed, ref, atol=1e-5, rtol=1e-5)
    assert jnp.allclose(weights, proj)

    # bf16 compute path (perf option, esp. v5e): in-kernel cast, f32 accumulation.
    fwd_bf16 = jax.jit(
        functools.partial(classifier_forward, compute_dtype=jnp.bfloat16)
    )
    transformed_bf16, _ = fwd_bf16(batch, proj)
    jax.block_until_ready(transformed_bf16)
    assert jnp.allclose(transformed_bf16, ref, atol=2e-2, rtol=2e-2)

    # TODO(synk): loss()/train()/evaluation()/set_optimizer()/load_model() are
    # host-side training loops (optimizer, scheduler, file I/O) and are
    # intentionally not kernelized.
    print("KERNEL_OK")
</pallas_src>

<mosaic_0001>
module attributes {stable_mosaic.version = 11 : i64} {
  func.func @_proj_matmul_kernel(%arg0: i32, %arg1: i32, %arg2: memref<16x32xf32, #tpu.memory_space<vmem>>, %arg3: memref<32x4xf32, #tpu.memory_space<vmem>>, %arg4: memref<16x4xf32, #tpu.memory_space<vmem>>) attributes {dimension_semantics = [#tpu.dimension_semantics<parallel>, #tpu.dimension_semantics<parallel>], iteration_bounds = array<i64: 1, 1>, scalar_prefetch = 0 : i64, scratch_operands = 0 : i64, tpu.core_type = #tpu.core_type<tc>, window_params = [{transform_indices = @transform_0, window_bounds = array<i64: 16, 32>}, {transform_indices = @transform_1, window_bounds = array<i64: 32, 4>}, {transform_indices = @transform_2, window_bounds = array<i64: 16, 4>}]} {
    %c0 = arith.constant 0 : index
    %c0_0 = arith.constant 0 : index
    %0 = vector.load %arg2[%c0, %c0_0] : memref<16x32xf32, #tpu.memory_space<vmem>>, vector<16x32xf32>
    %c0_1 = arith.constant 0 : index
    %c0_2 = arith.constant 0 : index
    %1 = vector.load %arg3[%c0_1, %c0_2] : memref<32x4xf32, #tpu.memory_space<vmem>>, vector<32x4xf32>
    %cst = arith.constant dense<0.000000e+00> : vector<16x4xf32>
    %2 = tpu.matmul %0, %1, %cst {dimension_numbers = #tpu.dot_dimension_numbers<[1], [0], [0], [1], [0, 0, 1, 1], [], []>} : vector<16x32xf32>, vector<32x4xf32>, vector<16x4xf32> -> vector<16x4xf32>
    %c0_3 = arith.constant 0 : index
    %c0_4 = arith.constant 0 : index
    %3 = vector.load %arg4[%c0_3, %c0_4] : memref<16x4xf32, #tpu.memory_space<vmem>>, vector<16x4xf32>
    tpu.vector_store %arg4[%c0_3, %c0_4], %2 {strides = array<i32>} : memref<16x4xf32, #tpu.memory_space<vmem>>, vector<16x4xf32>,
    return
  }
  func.func @transform_0(%arg0: i32, %arg1: i32) -> (i32, i32) {
    %c0_i32 = arith.constant 0 : i32
    %c0_i32_0 = arith.constant 0 : i32
    return %arg0, %c0_i32 : i32, i32
  }
  func.func @transform_1(%arg0: i32, %arg1: i32) -> (i32, i32) {
    %c0_i32 = arith.constant 0 : i32
    %c0_i32_0 = arith.constant 0 : i32
    return %c0_i32, %arg1 : i32, i32
  }
  func.func @transform_2(%arg0: i32, %arg1: i32) -> (i32, i32) {
    %c0_i32 = arith.constant 0 : i32
    return %arg0, %arg1 : i32, i32
  }
}

</mosaic_0001>

<llo_original>
// kernel: classifier_forward.1
$region0: #{classifier_forward.1}
  #allocation0 [shape = 'u32[]', space=smem, size = 0x4, offset = 0x4, fixed_abs, tag = 'smem constant byte address 0x4 - core index']
  #allocation1 [shape = 'u32[72,128]{1,0:T(1,128)}', space=vmem, size = 0x9000, scoped, tag = 'internal scratch']
  %s0 = inlined_call_operand.vmem [shape: f32[16,32], index: 0, kind: input, shape index: {}]
  %s1 = inlined_call_operand.vmem [shape: f32[32,4], index: 1, kind: input, shape index: {}]
  %s2 = inlined_call_operand.vmem [shape: f32[16,4], index: 2, kind: output, shape index: {}]
  %s3 = sld [smem:[#allocation0]]
  $region18: #{classifier_forward.1} parent=0
    _
  %s5 = ssub.s32 1, %s3
  %s6 = scalar_select 0, %s5, %s3
  // Predicated region
  $region2: #{classifier_forward.1} parent=0 // pred_check
    _
  $region3: #{classifier_forward.1} parent=0 // pred_check_branch
    %8 = sbr.rel (0) target = $region5
  $region4: #{classifier_forward.1} parent=0 // pred_region
    _
  $region5: #{classifier_forward.1} parent=0 // pred_fallthru
    _
  // Predicated region
  $region6: #{classifier_forward.1} parent=0 // pred_check
    _
  $region7: #{classifier_forward.1} parent=0 // pred_check_branch
    %10 = sbr.rel (0) target = $region9
  $region8: #{classifier_forward.1} parent=0 // pred_region
    _
  $region9: #{classifier_forward.1} parent=0 // pred_fallthru
    _
  %v11 = vld [vmem:[%s0] sm:$0xff]
  %v12 = vld [vmem:[%s0 + $0x8] sm:$0xff]
  %v13 = vld [vmem:[%s1] sm:$0xff]
  %v14 = vld [vmem:[%s1 + $0x8] sm:$0xff]
  %v15 = vld [vmem:[%s1 + $0x10] sm:$0xff]
  %v16 = vld [vmem:[%s1 + $0x18] sm:$0xff]
  %vm17 = vcmask 261120
  %v19 = vsel %vm17, %v11, 0
  %v22 = vsel %vm17, %v12, 0
  %24 = vmatpush.msra.mxu0 0.0
  %25 = vmatpush.msra.mxu0 0.0
  %26 = vmatpush.msra.mxu0 0.0
  %27 = vmatpush.msra.mxu0 0.0
  %28 = vmatpush.msra.mxu0 0.0
  %29 = vmatpush.msra.mxu0 0.0
  %30 = vmatpush.msra.mxu0 0.0
  %31 = vmatpush.msra.mxu0 0.0
  %32 = vmatpush.msra.mxu0 0.0
  %33 = vmatpush.msra.mxu0 0.0
  %34 = vmatpush.msra.mxu0 0.0
  %35 = vmatpush.msra.mxu0 0.0
  %36 = vmatpush.msra.mxu0 %v16
  %37 = vmatpush.msra.mxu0 %v15
  %38 = vmatpush.msra.mxu0 %v14
  %39 = vmatpush.msra.mxu0 %v13
  %40 = vmatmul.f32.gmra.mxu0 %v19
  %v41 = vpop.f32.mrf.mxu0
  %v42 = vadd.f32 0.0, %v41
  %43 = vmatmul.f32.gmra.mxu0 %v22
  %v44 = vpop.f32.mrf.mxu0
  %v45 = vadd.f32 0.0, %v44
  %46 = vdwg.mxu0
  %vm47 = vcmask 31744
  %48 = vst.msk [vmem:[%s2] sm:$0xff] %vm47, %v42
  %49 = vst.msk [vmem:[%s2 + $0x8] sm:$0xff] %vm47, %v45
  // Predicated region
  $region10: #{classifier_forward.1} parent=0 // pred_check
    _
  $region11: #{classifier_forward.1} parent=0 // pred_check_branch
    %51 = sbr.rel (0) target = $region13
  $region12: #{classifier_forward.1} parent=0 // pred_region
    _
  $region13: #{classifier_forward.1} parent=0 // pred_fallthru
    _
  // Predicated region
  $region14: #{classifier_forward.1} parent=0 // pred_check
    _
  $region15: #{classifier_forward.1} parent=0 // pred_check_branch
    %53 = sbr.rel (0) target = $region17
  $region16: #{classifier_forward.1} parent=0 // pred_region
    _
  $region17: #{classifier_forward.1} parent=0 // pred_fallthru
    _

</llo_original>
